<compile_context>
chip_gen: v7x
topology: tpu7x:2x2x1
jax: 0.10.0
libtpu: 0.0.40
codegen_flags: <defaults>
</compile_context>

<pallas_src>
import jax
import jax.numpy as jnp
from jax import lax
from jax.experimental import pallas as pl
from jax.experimental.pallas import tpu as pltpu


def _round_up(x, m):
    return (x + m - 1) // m * m


def _polyloss_rows_kernel(logits_ref, targets_ref, ce_ref, pt_ref):
    """One batch tile: per-row -log p_target (ce_i) and p_target (pt_i)."""
    x = logits_ref[...].astype(jnp.float32)              # (TILE_N, C_pad)
    t = targets_ref[...]                                 # (TILE_N, 1) int32

    # Numerically-stable softmax pieces (padded class cols hold -1e30 -> exp()=0).
    m = jnp.max(x, axis=1, keepdims=True)                # (TILE_N, 1)
    e = jnp.exp(x - m)                                   # (TILE_N, C_pad)  EUP
    s = jnp.sum(e, axis=1, keepdims=True)                # (TILE_N, 1)      XLU

    # one_hot(target) via lane-iota compare (no gather needed).
    col = lax.broadcasted_iota(jnp.int32, x.shape, 1)    # (TILE_N, C_pad)
    onehot = (col == t).astype(jnp.float32)

    logit_t = jnp.sum(x * onehot, axis=1, keepdims=True)  # logit at target class
    e_t = jnp.sum(e * onehot, axis=1, keepdims=True)      # exp(logit_t - m)

    ce_ref[...] = (jnp.log(s) + m) - logit_t              # -log p_{i,y_i}
    pt_ref[...] = e_t / s                                  # p_{i,y_i} (no 2nd exp)


def poly_loss(outputs, targets, epsilon=2.0):
    """outputs: (N, C) float logits, targets: (N,) int labels -> scalar f32 loss."""
    n, c = outputs.shape
    itemsize = jnp.dtype(outputs.dtype).itemsize

    # ---- lane-dense class dim -------------------------------------------------
    c_pad = _round_up(max(c, 128), 128)
    # TODO(synk): for vocab-scale C (>= ~64K) add a second ("arbitrary") grid axis
    # over the class dim with an online logsumexp instead of one (TILE_N, C) block.

    # ---- per-generation tile sizing (v5e/v6e: 128 MiB VMEM, v7x: 64 MiB/TC) ----
    try:
        vmem_cap = int(pltpu.get_tpu_info().vmem_capacity_bytes)
    except Exception:
        vmem_cap = 64 * 1024 * 1024  # conservative default (v7x per-core)
    buf_budget = max(1 << 20, min(16 << 20, vmem_cap // 8))  # per logits buffer

    sub = 8 if itemsize >= 4 else 16            # sublane packing (f32 vs bf16)
    tile_n = max(sub, min(1024, buf_budget // (c_pad * itemsize)))
    tile_n = max(sub, (tile_n // sub) * sub)
    tile_n = min(tile_n, _round_up(n, sub))
    n_pad = _round_up(n, tile_n)
    grid = (n_pad // tile_n,)

    # ---- pad inputs: padded class cols = -1e30 (exp -> 0); padded rows = 0 and
    #      are sliced off after the call ----------------------------------------
    logits = outputs
    if c_pad != c:
        logits = jnp.pad(logits, ((0, 0), (0, c_pad - c)), constant_values=-1e30)
    if n_pad != n:
        logits = jnp.pad(logits, ((0, n_pad - n), (0, 0)))
    targets_2d = targets.reshape(n, 1).astype(jnp.int32)
    if n_pad != n:
        targets_2d = jnp.pad(targets_2d, ((0, n_pad - n), (0, 0)))

    cost = pl.CostEstimate(
        flops=6 * n_pad * c_pad,
        transcendentals=n_pad * c_pad + 2 * n_pad,
        bytes_accessed=n_pad * c_pad * itemsize + n_pad * 4 + 2 * n_pad * 4,
    )

    ce_rows, pt_rows = pl.pallas_call(
        _polyloss_rows_kernel,
        grid=grid,
        in_specs=[
            pl.BlockSpec((tile_n, c_pad), lambda i: (i, 0)),
            pl.BlockSpec((tile_n, 1), lambda i: (i, 0)),
        ],
        out_specs=(
            pl.BlockSpec((tile_n, 1), lambda i: (i, 0)),
            pl.BlockSpec((tile_n, 1), lambda i: (i, 0)),
        ),
        out_shape=(
            jax.ShapeDtypeStruct((n_pad, 1), jnp.float32),
            jax.ShapeDtypeStruct((n_pad, 1), jnp.float32),
        ),
        compiler_params=pltpu.CompilerParams(
            dimension_semantics=("parallel",),
            vmem_limit_bytes=int(max(16 << 20, min(vmem_cap // 2, 64 << 20))),
        ),
        cost_estimate=cost,
    )(logits, targets_2d)

    # Tiny finalize in plain JAX (padded rows sliced off):
    #   loss = mean(ce_i) + eps * (1 - mean(pt_i))
    ce = jnp.mean(ce_rows[:n, 0])
    pt = jnp.mean(pt_rows[:n, 0])
    return ce + epsilon * (1.0 - pt)


def _poly_loss_ref(outputs, targets, epsilon=2.0):
    """Pure-JAX reference mirroring the PyTorch module."""
    logits = outputs.astype(jnp.float32)
    logp = jax.nn.log_softmax(logits, axis=1)
    c = outputs.shape[1]
    onehot = jax.nn.one_hot(targets, c, dtype=jnp.float32)
    ce = jnp.mean(-jnp.sum(onehot * logp, axis=1))
    pt = jnp.sum(onehot * jax.nn.softmax(logits, axis=1), axis=1)
    return jnp.mean(ce + epsilon * (1.0 - pt))


if __name__ == "__main__":
    key = jax.random.PRNGKey(0)
    k_logits, k_targets = jax.random.split(key)

    N, C = 10, 32  # small synthetic shapes: batch=10 (exercises row padding), classes=32
    outputs = jax.random.normal(k_logits, (N, C), dtype=jnp.float32)
    targets = jax.random.randint(k_targets, (N,), 0, C, dtype=jnp.int32)

    loss = jax.block_until_ready(poly_loss(outputs, targets, epsilon=2.0))
    ref = jax.block_until_ready(_poly_loss_ref(outputs, targets, epsilon=2.0))
    assert jnp.allclose(loss, ref, rtol=1e-5, atol=1e-5), (loss, ref)

    # bf16 logits stay bf16 across the HBM->VMEM DMA (cast to f32 in-kernel).
    outputs_bf16 = outputs.astype(jnp.bfloat16)
    loss_bf = jax.block_until_ready(poly_loss(outputs_bf16, targets, epsilon=2.0))
    ref_bf = jax.block_until_ready(_poly_loss_ref(outputs_bf16, targets, epsilon=2.0))
    assert jnp.allclose(loss_bf, ref_bf, rtol=1e-4, atol=1e-4), (loss_bf, ref_bf)

    print("KERNEL_OK")
</pallas_src>

<mosaic_0001>
module attributes {stable_mosaic.version = 11 : i64} {
  func.func @_polyloss_rows_kernel(%arg0: i32, %arg1: memref<16x128xf32, #tpu.memory_space<vmem>>, %arg2: memref<16x1xi32, #tpu.memory_space<vmem>>, %arg3: memref<16x1xf32, #tpu.memory_space<vmem>>, %arg4: memref<16x1xf32, #tpu.memory_space<vmem>>) attributes {dimension_semantics = [#tpu.dimension_semantics<parallel>], iteration_bounds = array<i64: 1>, scalar_prefetch = 0 : i64, scratch_operands = 0 : i64, tpu.core_type = #tpu.core_type<tc>, window_params = [{transform_indices = @transform_0, window_bounds = array<i64: 16, 128>}, {transform_indices = @transform_1, window_bounds = array<i64: 16, 1>}, {transform_indices = @transform_2, window_bounds = array<i64: 16, 1>}, {transform_indices = @transform_3, window_bounds = array<i64: 16, 1>}]} {
    %c0 = arith.constant 0 : index
    %c0_0 = arith.constant 0 : index
    %0 = vector.load %arg1[%c0, %c0_0] : memref<16x128xf32, #tpu.memory_space<vmem>>, vector<16x128xf32>
    %c0_1 = arith.constant 0 : index
    %c0_2 = arith.constant 0 : index
    %1 = vector.load %arg2[%c0_1, %c0_2] : memref<16x1xi32, #tpu.memory_space<vmem>>, vector<16x1xi32>
    %cst = arith.constant dense<0xFF800000> : vector<16xf32>
    %2 = vector.multi_reduction <maximumf>, %0, %cst [1] : vector<16x128xf32> to vector<16xf32>
    %3 = vector.shape_cast %2 : vector<16xf32> to vector<16x1xf32>
    %4 = vector.broadcast %3 : vector<16x1xf32> to vector<16x128xf32>
    %5 = arith.subf %0, %4 : vector<16x128xf32>
    %6 = math.exp %5 : vector<16x128xf32>
    %cst_3 = arith.constant dense<0.000000e+00> : vector<16xf32>
    %7 = vector.multi_reduction <add>, %6, %cst_3 [1] : vector<16x128xf32> to vector<16xf32>
    %8 = vector.shape_cast %7 : vector<16xf32> to vector<16x1xf32>
    %9 = tpu.iota {dimensions = array<i32: 1>} : vector<16x128xi32>
    %10 = vector.broadcast %1 : vector<16x1xi32> to vector<16x128xi32>
    %11 = arith.cmpi eq, %9, %10 : vector<16x128xi32>
    %12 = arith.extui %11 : vector<16x128xi1> to vector<16x128xi32>
    %13 = arith.sitofp %12 : vector<16x128xi32> to vector<16x128xf32>
    %14 = arith.mulf %0, %13 : vector<16x128xf32>
    %cst_4 = arith.constant dense<0.000000e+00> : vector<16xf32>
    %15 = vector.multi_reduction <add>, %14, %cst_4 [1] : vector<16x128xf32> to vector<16xf32>
    %16 = vector.shape_cast %15 : vector<16xf32> to vector<16x1xf32>
    %17 = arith.mulf %6, %13 : vector<16x128xf32>
    %cst_5 = arith.constant dense<0.000000e+00> : vector<16xf32>
    %18 = vector.multi_reduction <add>, %17, %cst_5 [1] : vector<16x128xf32> to vector<16xf32>
    %19 = vector.shape_cast %18 : vector<16xf32> to vector<16x1xf32>
    %20 = math.log %8 : vector<16x1xf32>
    %21 = arith.addf %20, %3 : vector<16x1xf32>
    %22 = arith.subf %21, %16 : vector<16x1xf32>
    %c0_6 = arith.constant 0 : index
    %c0_7 = arith.constant 0 : index
    %23 = vector.load %arg3[%c0_6, %c0_7] : memref<16x1xf32, #tpu.memory_space<vmem>>, vector<16x1xf32>
    tpu.vector_store %arg3[%c0_6, %c0_7], %22 {strides = array<i32>} : memref<16x1xf32, #tpu.memory_space<vmem>>, vector<16x1xf32>,
    %24 = arith.divf %19, %8 : vector<16x1xf32>
    %c0_8 = arith.constant 0 : index
    %c0_9 = arith.constant 0 : index
    %25 = vector.load %arg4[%c0_8, %c0_9] : memref<16x1xf32, #tpu.memory_space<vmem>>, vector<16x1xf32>
    tpu.vector_store %arg4[%c0_8, %c0_9], %24 {strides = array<i32>} : memref<16x1xf32, #tpu.memory_space<vmem>>, vector<16x1xf32>,
    return
  }
  func.func @transform_0(%arg0: i32) -> (i32, i32) {
    %c0_i32 = arith.constant 0 : i32
    %c0_i32_0 = arith.constant 0 : i32
    return %arg0, %c0_i32 : i32, i32
  }
  func.func @transform_1(%arg0: i32) -> (i32, i32) {
    %c0_i32 = arith.constant 0 : i32
    %c0_i32_0 = arith.constant 0 : i32
    return %arg0, %c0_i32 : i32, i32
  }
  func.func @transform_2(%arg0: i32) -> (i32, i32) {
    %c0_i32 = arith.constant 0 : i32
    %c0_i32_0 = arith.constant 0 : i32
    return %arg0, %c0_i32 : i32, i32
  }
  func.func @transform_3(%arg0: i32) -> (i32, i32) {
    %c0_i32 = arith.constant 0 : i32
    %c0_i32_0 = arith.constant 0 : i32
    return %arg0, %c0_i32 : i32, i32
  }
}

</mosaic_0001>

<llo_original>
// kernel: tpu_custom_call.1
$region0: #{tpu_custom_call.1}
  #allocation0 [shape = 'u32[]', space=smem, size = 0x4, offset = 0x4, fixed_abs, tag = 'smem constant byte address 0x4 - core index']
  #allocation1 [shape = 'u32[144,128]{1,0:T(1,128)}', space=vmem, size = 0x12000, scoped, tag = 'internal scratch']
  %s0 = inlined_call_operand.vmem [shape: f32[16,128], index: 0, kind: input, shape index: {}]
  %s1 = inlined_call_operand.vmem [shape: s32[16,1], index: 1, kind: input, shape index: {}]
  %s2 = inlined_call_operand.vmem [shape: f32[16,1], index: 2, kind: output, shape index: {0}]
  %s3 = inlined_call_operand.vmem [shape: f32[16,1], index: 3, kind: output, shape index: {1}]
  %4 = xla_tuple %s2, %s3
  %s5 = sld [smem:[#allocation0]]
  $region26: #{tpu_custom_call.1} parent=0
    _
  %s7 = ssub.s32 1, %s5
  %s8 = scalar_select 0, %s7, %s5
  // Predicated region
  $region2: #{tpu_custom_call.1} parent=0 // pred_check
    _
  $region3: #{tpu_custom_call.1} parent=0 // pred_check_branch
    %10 = sbr.rel (0) target = $region5
  $region4: #{tpu_custom_call.1} parent=0 // pred_region
    _
  $region5: #{tpu_custom_call.1} parent=0 // pred_fallthru
    _
  // Predicated region
  $region6: #{tpu_custom_call.1} parent=0 // pred_check
    _
  $region7: #{tpu_custom_call.1} parent=0 // pred_check_branch
    %12 = sbr.rel (0) target = $region9
  $region8: #{tpu_custom_call.1} parent=0 // pred_region
    _
  $region9: #{tpu_custom_call.1} parent=0 // pred_fallthru
    _
  %v13 = vld [vmem:[%s0] sm:$0xff]
  %v14 = vld [vmem:[%s0 + $0x8] sm:$0xff]
  %v15 = vld [vmem:[%s1] sm:$0xff]
  %v16 = vld [vmem:[%s1 + $0x8] sm:$0xff]
  %17 = vmax.xlane.f32.xlu0 %v13
  %v18 = vpop.xlane.xlu0 %17
  %19 = vmax.xlane.f32.xlu0 %v14
  %v20 = vpop.xlane.xlu0 %19
  %v21 = vsub.f32 %v13, %v18
  %v22 = vsub.f32 %v14, %v20
  %v23 = vmul.f32 %v21, 1.442695
  %v24 = vpow.pop %v23
  %v25 = vmul.f32 %v22, 1.442695
  %v26 = vpow.pop %v25
  %27 = vadd.xlane.f32.xlu0 %v24
  %v28 = vpop.xlane.xlu0 %27
  %29 = vadd.xlane.f32.xlu0 %v26
  %v30 = vpop.xlane.xlu0 %29
  %v31 = vlaneseq
  %v32 = vand.u32 %v31, 127
  %33 = vset.pattern.permute.xlu0 0
  %34 = vperm.xlu0 %33, %v15
  %v35 = vpop.permute.xlu0 %34
  %36 = vset.pattern.permute.xlu0 0
  %37 = vperm.xlu0 %36, %v16
  %v38 = vpop.permute.xlu0 %37
  %vm39 = vcmp.eq.s32.totalorder %v32, %v35
  %vm40 = vcmp.eq.s32.totalorder %v32, %v38
  %v41 = vsel %vm39, 1, 0
  %v42 = vsel %vm40, 1, 0
  %v43 = vcvt.s32.f32 %v41
  %v44 = vcvt.s32.f32 %v42
  %v45 = vmul.f32 %v13, %v43
  %v46 = vmul.f32 %v14, %v44
  %47 = vadd.xlane.f32.xlu0 %v45
  %v48 = vpop.xlane.xlu0 %47
  %49 = vadd.xlane.f32.xlu0 %v46
  %v50 = vpop.xlane.xlu0 %49
  %v51 = vmul.f32 %v24, %v43
  %v52 = vmul.f32 %v26, %v44
  %53 = vadd.xlane.f32.xlu0 %v51
  %v54 = vpop.xlane.xlu0 %53
  %55 = vadd.xlane.f32.xlu0 %v52
  %v56 = vpop.xlane.xlu0 %55
  %v57 = vlog2.pop %v28
  %v58 = vmul.f32 %v57, 0.6931472
  %v59 = vlog2.pop %v30
  %v60 = vmul.f32 %v59, 0.6931472
  %v61 = vadd.f32 %v58, %v18
  %v62 = vadd.f32 %v60, %v20
  %v63 = vsub.f32 %v61, %v48
  %v64 = vsub.f32 %v62, %v50
  %vm65 = vcmask 7168
  %66 = vst.msk [vmem:[%s2] sm:$0xff] %vm65, %v63
  %67 = vst.msk [vmem:[%s2 + $0x8] sm:$0xff] %vm65, %v64
  %v68 = vrcp.pop %v28
  %v69 = vmul.f32 %v54, %v68
  %v70 = vrcp.pop %v30
  %v71 = vmul.f32 %v56, %v70
  %72 = vst.msk [vmem:[%s3] sm:$0xff] %vm65, %v69
  %73 = vst.msk [vmem:[%s3 + $0x8] sm:$0xff] %vm65, %v71
  // Predicated region
  $region10: #{tpu_custom_call.1} parent=0 // pred_check
    _
  $region11: #{tpu_custom_call.1} parent=0 // pred_check_branch
    %75 = sbr.rel (0) target = $region13
  $region12: #{tpu_custom_call.1} parent=0 // pred_region
    _
  $region13: #{tpu_custom_call.1} parent=0 // pred_fallthru
    _
  // Predicated region
  $region14: #{tpu_custom_call.1} parent=0 // pred_check
    _
  $region15: #{tpu_custom_call.1} parent=0 // pred_check_branch
    %77 = sbr.rel (0) target = $region17
  $region16: #{tpu_custom_call.1} parent=0 // pred_region
    _
  $region17: #{tpu_custom_call.1} parent=0 // pred_fallthru
    _
  // Predicated region
  $region18: #{tpu_custom_call.1} parent=0 // pred_check
    _
  $region19: #{tpu_custom_call.1} parent=0 // pred_check_branch
    %79 = sbr.rel (0) target = $region21
  $region20: #{tpu_custom_call.1} parent=0 // pred_region
    _
  $region21: #{tpu_custom_call.1} parent=0 // pred_fallthru
    _
  // Predicated region
  $region22: #{tpu_custom_call.1} parent=0 // pred_check
    _
  $region23: #{tpu_custom_call.1} parent=0 // pred_check_branch
    %81 = sbr.rel (0) target = $region25
  $region24: #{tpu_custom_call.1} parent=0 // pred_region
    _
  $region25: #{tpu_custom_call.1} parent=0 // pred_fallthru
    _

</llo_original>
